<compile_context>
chip_gen: v5e
topology: v5e:2x2
jax: 0.10.0
libtpu: 0.0.40
codegen_flags: <defaults>
</compile_context>

<pallas_src>
import jax
import jax.numpy as jnp
from jax.experimental import pallas as pl
from jax.experimental.pallas import tpu as pltpu


def _conv1x1_kernel(x_ref, w_ref, b_ref, o_ref):
    # x_ref: (Cin, ts)   w_ref: (Cout, Cin)   b_ref: (Cout, 1)   o_ref: (Cout, ts)
    acc = jnp.dot(
        w_ref[...],
        x_ref[...],
        preferred_element_type=jnp.float32,
        precision=jax.lax.Precision.HIGHEST,  # keep true-f32 accuracy (K is tiny)
    )
    o_ref[...] = (acc + b_ref[...]).astype(o_ref.dtype)


def _round_up(x, m):
    return ((x + m - 1) // m) * m


def _pick_spatial_tile(
    s,
    cin,
    cout,
    dtype,
    n_batch,
    vmem_budget_bytes=24 * 1024 * 1024,   # double-buffered in+out, v7x-safe
    max_lanes=131072,
):
    """Lane-dense spatial tile.

    - Uses sublane-padded channel counts so the VMEM estimate matches what
      Mosaic actually allocates (f32 -> 8, bf16 -> 16, int8/fp8 -> 32 sublanes).
    - Targets ~24 MiB of double-buffered (input + output) tiles: fits the
      32 MiB scoped VMEM limit on v7x and is trivially safe on v5e/v6e.
    - Prefers the largest multiple-of-128 divisor of S below the cap so the
      last spatial block is not ragged.
    - Ensures the grid has >= 2 blocks (when S allows) so both v7x
      TensorCores get work even at N=1.
    """
    if s <= 128:
        return s  # full-extent block satisfies the lane constraint exactly

    itemsize = jnp.dtype(dtype).itemsize
    min_sublane = max(8, 32 // itemsize)            # f32->8, bf16->16, i8/fp8->32
    pad_cin = _round_up(cin, min_sublane)
    pad_cout = _round_up(cout, min_sublane)
    per_lane = 2 * (pad_cin + pad_cout) * itemsize  # double-buffered in + out

    cap = max(128, vmem_budget_bytes // max(per_lane, 1))
    cap = min(cap, s, max_lanes)

    # Megacore guarantee (v7x has 2 TCs): ensure >= 2 blocks total.
    if n_batch * pl.cdiv(s, cap) < 2:
        half = max(128, ((-(-s // 2)) // 128) * 128)  # round_down_128(ceil(s/2))
        cap = min(cap, half)

    cap = max(128, (cap // 128) * 128)

    # Largest multiple-of-128 divisor of s that fits the cap -> no ragged block.
    t = cap
    while t >= 128:
        if s % t == 0:
            return t
        t -= 128
    return cap  # no clean divisor; Pallas masks the ragged final block


def fusion_conv_forward(x_ncdhw, weight, bias):
    """1x1x1 Conv3d forward.

    x_ncdhw: (N, Cin, D, H, W)
    weight:  (Cout, Cin)   -- squeezed from PyTorch's (Cout, Cin, 1, 1, 1)
    bias:    (Cout,)
    returns: (N, Cout, D, H, W)
    """
    n, cin = int(x_ncdhw.shape[0]), int(x_ncdhw.shape[1])
    spatial_shape = x_ncdhw.shape[2:]
    s = 1
    for d in spatial_shape:
        s *= int(d)
    cout = int(weight.shape[0])
    itemsize = jnp.dtype(x_ncdhw.dtype).itemsize

    # Free reshape (NCDHW is contiguous over the spatial dims).
    x3 = x_ncdhw.reshape(n, cin, s)
    b2d = bias.reshape(cout, 1)

    ts = _pick_spatial_tile(s, cin, cout, x_ncdhw.dtype, n)
    grid = (n, pl.cdiv(s, ts))

    bytes_accessed = (
        n * cin * s * itemsize          # read x
        + n * cout * s * itemsize       # write y
        + cout * cin * itemsize         # read W
        + cout * itemsize               # read b
    )

    y3 = pl.pallas_call(
        _conv1x1_kernel,
        out_shape=jax.ShapeDtypeStruct((n, cout, s), x_ncdhw.dtype),
        grid_spec=pltpu.PrefetchScalarGridSpec(
            num_scalar_prefetch=0,
            grid=grid,
            in_specs=[
                # x: squeeze the batch dim, tile the spatial (lane) axis.
                pl.BlockSpec((None, cin, ts), lambda i, j: (i, 0, j)),
                # Weight and bias are small and resident (constant index_map).
                pl.BlockSpec((cout, cin), lambda i, j: (0, 0)),
                pl.BlockSpec((cout, 1), lambda i, j: (0, 0)),
            ],
            out_specs=pl.BlockSpec((None, cout, ts), lambda i, j: (i, 0, j)),
        ),
        compiler_params=pltpu.CompilerParams(
            # Both axes parallel so v7x megacore shards the grid across TCs.
            dimension_semantics=("parallel", "parallel"),
            # 32 MiB: > v5e's 16 MiB scoped default, within v7x's 64 MiB physical.
            vmem_limit_bytes=32 * 1024 * 1024,
        ),
        cost_estimate=pl.CostEstimate(
            flops=2 * n * s * cin * cout,
            transcendentals=0,
            bytes_accessed=bytes_accessed,
        ),
    )(x3, weight, b2d)

    return y3.reshape((n, cout) + tuple(spatial_shape))


if __name__ == "__main__":
    key = jax.random.PRNGKey(0)
    k_x, k_w, k_b = jax.random.split(key, 3)

    # Small shapes consistent with Conv3d: N=2, Cin=4, D=H=W=8, Cout=8.
    N, Cin, Cout, D, H, W = 2, 4, 8, 8, 8, 8

    # TODO(synk): feed bf16 activations here for a near-2x HBM-bandwidth win if
    # model precision allows; the kernel keeps an f32 accumulator either way.
    x = jax.random.normal(k_x, (N, Cin, D, H, W), dtype=jnp.float32)
    # Deterministic parameter init (mimics PyTorch uniform(-1/sqrt(fan_in), +)).
    bound = 1.0 / jnp.sqrt(jnp.float32(Cin))
    weight = jax.random.uniform(k_w, (Cout, Cin), jnp.float32, -bound, bound)
    bias = jax.random.uniform(k_b, (Cout,), jnp.float32, -bound, bound)

    y = fusion_conv_forward(x, weight, bias)
    y = jax.block_until_ready(y)

    # Reference check (plain JAX einsum over channels).
    y_ref = jnp.einsum(
        "ncdhw,oc->nodhw", x, weight, precision=jax.lax.Precision.HIGHEST
    ) + bias[None, :, None, None, None]
    assert y.shape == (N, Cout, D, H, W)
    assert jnp.allclose(y, y_ref, atol=1e-5, rtol=1e-5)

    print("KERNEL_OK")
</pallas_src>

<mosaic_0001>
module attributes {stable_mosaic.version = 11 : i64} {
  func.func @_conv1x1_kernel(%arg0: i32, %arg1: i32, %arg2: memref<1x4x512xf32, #tpu.memory_space<vmem>>, %arg3: memref<8x4xf32, #tpu.memory_space<vmem>>, %arg4: memref<8x1xf32, #tpu.memory_space<vmem>>, %arg5: memref<1x8x512xf32, #tpu.memory_space<vmem>>) attributes {dimension_semantics = [#tpu.dimension_semantics<parallel>, #tpu.dimension_semantics<parallel>], iteration_bounds = array<i64: 2, 1>, scalar_prefetch = 0 : i64, scratch_operands = 0 : i64, tpu.core_type = #tpu.core_type<tc>, window_params = [{transform_indices = @transform_0, window_bounds = array<i64: 1, 4, 512>}, {pipeline_mode = #tpu.pipeline_mode<synchronous>, transform_indices = @transform_1, window_bounds = array<i64: 8, 4>}, {pipeline_mode = #tpu.pipeline_mode<synchronous>, transform_indices = @transform_2, window_bounds = array<i64: 8, 1>}, {transform_indices = @transform_3, window_bounds = array<i64: 1, 8, 512>}]} {
    %c0 = arith.constant 0 : index
    %c0_0 = arith.constant 0 : index
    %0 = vector.load %arg3[%c0, %c0_0] : memref<8x4xf32, #tpu.memory_space<vmem>>, vector<8x4xf32>
    %c0_1 = arith.constant 0 : index
    %c0_2 = arith.constant 0 : index
    %c0_3 = arith.constant 0 : index
    %1 = vector.load %arg2[%c0_1, %c0_2, %c0_3] : memref<1x4x512xf32, #tpu.memory_space<vmem>>, vector<1x4x512xf32>
    %2 = vector.shape_cast %1 : vector<1x4x512xf32> to vector<4x512xf32>
    %cst = arith.constant dense<0.000000e+00> : vector<8x512xf32>
    %3 = tpu.matmul %0, %2, %cst {dimension_numbers = #tpu.dot_dimension_numbers<[1], [0], [0], [1], [0, 0, 1, 1], [], []>, precision = #tpu.contract_precision<fp32>} : vector<8x4xf32>, vector<4x512xf32>, vector<8x512xf32> -> vector<8x512xf32>
    %c0_4 = arith.constant 0 : index
    %c0_5 = arith.constant 0 : index
    %4 = vector.load %arg4[%c0_4, %c0_5] : memref<8x1xf32, #tpu.memory_space<vmem>>, vector<8x1xf32>
    %5 = vector.broadcast %4 : vector<8x1xf32> to vector<8x512xf32>
    %6 = arith.addf %3, %5 : vector<8x512xf32>
    %c0_6 = arith.constant 0 : index
    %c0_7 = arith.constant 0 : index
    %c0_8 = arith.constant 0 : index
    %7 = vector.load %arg5[%c0_6, %c0_7, %c0_8] : memref<1x8x512xf32, #tpu.memory_space<vmem>>, vector<1x8x512xf32>
    %8 = vector.shape_cast %7 : vector<1x8x512xf32> to vector<8x512xf32>
    %9 = vector.shape_cast %6 : vector<8x512xf32> to vector<1x8x512xf32>
    tpu.vector_store %arg5[%c0_6, %c0_7, %c0_8], %9 {strides = array<i32>} : memref<1x8x512xf32, #tpu.memory_space<vmem>>, vector<1x8x512xf32>,
    return
  }
  func.func @transform_0(%arg0: i32, %arg1: i32) -> (i32, i32, i32) {
    %c0_i32 = arith.constant 0 : i32
    %c0_i32_0 = arith.constant 0 : i32
    return %arg0, %c0_i32, %arg1 : i32, i32, i32
  }
  func.func @transform_1(%arg0: i32, %arg1: i32) -> (i32, i32) {
    %c0_i32 = arith.constant 0 : i32
    %c0_i32_0 = arith.constant 0 : i32
    %c0_i32_1 = arith.constant 0 : i32
    return %c0_i32, %c0_i32_0 : i32, i32
  }
  func.func @transform_2(%arg0: i32, %arg1: i32) -> (i32, i32) {
    %c0_i32 = arith.constant 0 : i32
    %c0_i32_0 = arith.constant 0 : i32
    %c0_i32_1 = arith.constant 0 : i32
    return %c0_i32, %c0_i32_0 : i32, i32
  }
  func.func @transform_3(%arg0: i32, %arg1: i32) -> (i32, i32, i32) {
    %c0_i32 = arith.constant 0 : i32
    %c0_i32_0 = arith.constant 0 : i32
    return %arg0, %c0_i32, %arg1 : i32, i32, i32
  }
}

</mosaic_0001>

<llo_original>
// kernel: tpu_custom_call.1
$region0: #{tpu_custom_call.1}
  #allocation0 [shape = 'u32[]', space=smem, size = 0x4, offset = 0x4, fixed_abs, tag = 'smem constant byte address 0x4 - core index']
  #allocation1 [shape = 'u32[72,128]{1,0:T(1,128)}', space=vmem, size = 0x9000, scoped, tag = 'internal scratch']
  %s0 = inlined_call_operand.hbm [shape: f32[2,4,512], index: 0, kind: input, shape index: {}]
  %s1 = inlined_call_operand.vmem [shape: f32[8,4], index: 1, kind: input, shape index: {}]
  %s2 = inlined_call_operand.vmem [shape: f32[8,1], index: 2, kind: input, shape index: {}]
  %s3 = inlined_call_operand.hbm [shape: f32[2,8,512], index: 3, kind: output, shape index: {}]
  %s4 = sld [smem:[#allocation0]]
  $region49: #{tpu_custom_call.1} parent=0
    _
  %s6 = ssub.s32 1, %s4
  %s7 = scalar_select 0, %s6, %s4
  $region1: #{tpu_custom_call.1} parent=0
    #allocation2 [shape = 'u8[16384]{0}', space=vmem, size = 0x4000, scoped, tag = 'input window, operand 0']
    #allocation3 [shape = 's32[2]{0}', space=sflag, size = 0x8, scoped, tag = 'scoped memory for tpu_custom_call.1']
    #allocation4 [shape = 's32[2]{0}', space=sflag, size = 0x8, scoped, tag = 'scoped memory for tpu_custom_call.1']
    #allocation5 [shape = 'u8[32768]{0}', space=vmem, size = 0x8000, scoped, tag = 'output window, operand 0']
    %8 = vsyncpa [#allocation3], 0
    %s9 = scalar_lea.sflag [#allocation3], 1
    %10 = vsyncpa %s9, 0
    %11 = vsyncpa [#allocation4], 0
    %s12 = scalar_lea.sflag [#allocation4], 1
    %13 = vsyncpa %s12, 0
    loop: start=0, step=1, limit=4
    $region2: #{tpu_custom_call.1} parent=1 // loop_pre_header
      _
    $region3: #{tpu_custom_call.1} parent=1 // loop_header
      %s15 = sphi 0, %s19
      %p16 = scmp.ge.s32.totalorder %s15, 4
      %s22 = sphi 0, %s34
      %s23 = sphi 0, %s30
      %s24 = sphi 0, %s22
      %s25 = sphi 0, %s23
      %s26 = sphi 0, %s24
      %s27 = sphi 0, %s25
      %s39 = sphi 0, %s41
      %s42 = sphi 0, %s39
      %s43 = sphi 0, %s42
      %s59 = sphi 0, %s43
      %s63 = sphi 0, %s63
      %s65 = sphi 0, %s63
      %s66 = sphi 0, %s65
      %s80 = sphi 0, %s66
      %s84 = sphi 0, %s84
      %s86 = sphi 0, %s84
      %s87 = sphi 0, %s86
      %s101 = sphi 0, %s87
      %s109 = sphi 0, %s111
      %s112 = sphi 0, %s109
      %s113 = sphi 0, %s112
      %s129 = sphi 0, %s113
    $region4: #{tpu_custom_call.1} parent=1 // loop_header_branch
      %18 = sbr.rel (%p16) target = $region8
    $region5: #{tpu_custom_call.1} parent=1 // loop_body
      %s20 = ssub.s32 %s15, 1
      %s21 = ssub.s32 %s15, 2
      %s28 = sadd.s32 1, %s23
      %p29 = scmp.ge.s32.totalorder %s28, 1
      %s30 = scalar_select %p29, 0, %s28
      %s31 = sadd.s32 1, %s22
      %s32 = scalar_select %p29, %s31, %s22
      %p33 = scmp.ge.s32.totalorder %s32, 2
      %s34 = scalar_select %p33, 0, %s32
      %s35 = ssub.s32 %s22, %s34
      %s36 = ssub.s32 %s23, %s30
      %s37 = sor.u32 %s35, %s36
      %p38 = scmp.eq.s32.totalorder %s37, 0
      %s40 = sadd.s32 %s39, 1
      %s41 = scalar_select %p38, %s39, %s40
      %p44 = pneg %p38
      %p45 = scmp.eq.s32.totalorder %s15, 1
      %p46 = por %p44, %p45
      %p47 = scmp.ne.s32.totalorder %s39, %s42
      %p48 = scmp.eq.s32.totalorder %s15, 0
      %p49 = por %p47, %p48
      %p50 = scmp.ne.s32.totalorder %s39, %s42
      %p51 = scmp.eq.s32.totalorder %s20, 1
      %p52 = por %p50, %p51
      %p53 = scmp.ne.s32.totalorder %s42, %s43
      %p54 = scmp.eq.s32.totalorder %s20, 0
      %p55 = por %p53, %p54
      %p56 = scmp.ne.s32.totalorder %s42, %s43
      %p57 = scmp.eq.s32.totalorder %s21, 1
      %p58 = por %p56, %p57
      %p60 = scmp.ne.s32.totalorder %s43, %s59
      %p61 = scmp.eq.s32.totalorder %s21, 0
      %p62 = por %p60, %p61
      %s64 = sadd.s32 %s63, 1
      %p67 = scmp.eq.s32.totalorder %s15, 1
      %p68 = scmp.ne.s32.totalorder %s63, %s65
      %p69 = scmp.eq.s32.totalorder %s15, 0
      %p70 = por %p68, %p69
      %p71 = scmp.ne.s32.totalorder %s63, %s65
      %p72 = scmp.eq.s32.totalorder %s20, 1
      %p73 = por %p71, %p72
      %p74 = scmp.ne.s32.totalorder %s65, %s66
      %p75 = scmp.eq.s32.totalorder %s20, 0
      %p76 = por %p74, %p75
      %p77 = scmp.ne.s32.totalorder %s65, %s66
      %p78 = scmp.eq.s32.totalorder %s21, 1
      %p79 = por %p77, %p78
      %p81 = scmp.ne.s32.totalorder %s66, %s80
      %p82 = scmp.eq.s32.totalorder %s21, 0
      %p83 = por %p81, %p82
      %s85 = sadd.s32 %s84, 1
      %p88 = scmp.eq.s32.totalorder %s15, 1
      %p89 = scmp.ne.s32.totalorder %s84, %s86
      %p90 = scmp.eq.s32.totalorder %s15, 0
      %p91 = por %p89, %p90
      %p92 = scmp.ne.s32.totalorder %s84, %s86
      %p93 = scmp.eq.s32.totalorder %s20, 1
      %p94 = por %p92, %p93
      %p95 = scmp.ne.s32.totalorder %s86, %s87
      %p96 = scmp.eq.s32.totalorder %s20, 0
      %p97 = por %p95, %p96
      %p98 = scmp.ne.s32.totalorder %s86, %s87
      %p99 = scmp.eq.s32.totalorder %s21, 1
      %p100 = por %p98, %p99
      %p102 = scmp.ne.s32.totalorder %s87, %s101
      %p103 = scmp.eq.s32.totalorder %s21, 0
      %p104 = por %p102, %p103
      %s105 = ssub.s32 %s22, %s34
      %s106 = ssub.s32 %s23, %s30
      %s107 = sor.u32 %s105, %s106
      %p108 = scmp.eq.s32.totalorder %s107, 0
      %s110 = sadd.s32 %s109, 1
      %s111 = scalar_select %p108, %s109, %s110
      %p114 = pneg %p108
      %p115 = scmp.eq.s32.totalorder %s15, 1
      %p116 = por %p114, %p115
      %p117 = scmp.ne.s32.totalorder %s109, %s112
      %p118 = scmp.eq.s32.totalorder %s15, 0
      %p119 = por %p117, %p118
      %p120 = scmp.ne.s32.totalorder %s109, %s112
      %p121 = scmp.eq.s32.totalorder %s20, 1
      %p122 = por %p120, %p121
      %p123 = scmp.ne.s32.totalorder %s112, %s113
      %p124 = scmp.eq.s32.totalorder %s20, 0
      %p125 = por %p123, %p124
      %p126 = scmp.ne.s32.totalorder %s112, %s113
      %p127 = scmp.eq.s32.totalorder %s21, 1
      %p128 = por %p126, %p127
      %p130 = scmp.ne.s32.totalorder %s113, %s129
      %p131 = scmp.eq.s32.totalorder %s21, 0
      %p132 = por %p130, %p131
      %p133 = scmp.le.s32.totalorder 1, %s15
      %p134 = scmp.lt.s32.totalorder %s15, 3
      %p135 = pnand %p133, %p134
      %p136 = pneg %p135
      // Predicated region
      $region9: #{tpu_custom_call.1} parent=5 // pred_check
        _
      $region10: #{tpu_custom_call.1} parent=5 // pred_check_branch
        %138 = sbr.rel (%p135) target = $region12
      $region11: #{tpu_custom_call.1} parent=5 // pred_region
        %s139 = ssub.s32 %s15, 1
        // Predicated region
        $region13: #{tpu_custom_call.1} parent=11 // pred_check
          %p140 = pneg %p76
        $region14: #{tpu_custom_call.1} parent=11 // pred_check_branch
          %142 = sbr.rel (%p140) target = $region16
        $region15: #{tpu_custom_call.1} parent=11 // pred_region
          _
        $region16: #{tpu_custom_call.1} parent=11 // pred_fallthru
          _
        // Predicated region
        $region17: #{tpu_custom_call.1} parent=11 // pred_check
          %p143 = pneg %p97
        $region18: #{tpu_custom_call.1} parent=11 // pred_check_branch
          %145 = sbr.rel (%p143) target = $region20
        $region19: #{tpu_custom_call.1} parent=11 // pred_region
          _
        $region20: #{tpu_custom_call.1} parent=11 // pred_fallthru
          _
      $region12: #{tpu_custom_call.1} parent=5 // pred_fallthru
        _
      %p146 = scmp.lt.s32.totalorder %s15, 2
      // Predicated region
      $region21: #{tpu_custom_call.1} parent=5 // pred_check
        %p147 = pneg %p146
      $region22: #{tpu_custom_call.1} parent=5 // pred_check_branch
        %149 = sbr.rel (%p147) target = $region24
      $region23: #{tpu_custom_call.1} parent=5 // pred_region
        // Predicated region
        $region25: #{tpu_custom_call.1} parent=23 // pred_check
          %p150 = pneg %p49
        $region26: #{tpu_custom_call.1} parent=23 // pred_check_branch
          %152 = sbr.rel (%p150) target = $region28
        $region27: #{tpu_custom_call.1} parent=23 // pred_region
          %s153 = sand.u32 %s39, 1
          %s154 = scalar_lea.sflag [#allocation3], %s153
          %s155 = sand.u32 %s39, 1
          %s156 = smul.addr %s155, 16
          %s157 = scalar_lea.vmem [#allocation2], %s156
          %s158 = smul.u32 4, %s23
          %160 = vsyncadd %s154, 0
          %s161 = smul.addr %s22, 4
          %s162 = sadd.s32 %s158, %s161
          %s163 = smul.addr %s162, 4
          %s164 = scalar_lea.hbm %s0, %s163
          %s166 = sshll.u32 %s164, 4
          %s167 = int_to_ptr.hbm [resolvable:$true] %s166
          %s168 = sshll.u32 %s157, 4
          %s169 = int_to_ptr.vmem [resolvable:$true] %s168
          %171 = dma.hbm_to_vmem [thread:$0]  %s167, 256, %s169, %s154
        $region28: #{tpu_custom_call.1} parent=23 // pred_fallthru
          _
      $region24: #{tpu_custom_call.1} parent=5 // pred_fallthru
        _
      %p172 = scmp.le.s32.totalorder 1, %s15
      %p173 = scmp.lt.s32.totalorder %s15, 3
      %p174 = pnand %p172, %p173
      %p175 = pneg %p174
      // Predicated region
      $region29: #{tpu_custom_call.1} parent=5 // pred_check
        _
      $region30: #{tpu_custom_call.1} parent=5 // pred_check_branch
        %177 = sbr.rel (%p174) target = $region32
      $region31: #{tpu_custom_call.1} parent=5 // pred_region
        %s178 = ssub.s32 %s15, 1
        %s179 = sand.u32 %s42, 1
        %s180 = scalar_lea.sflag [#allocation3], %s179
        %s181 = sand.u32 %s42, 1
        %s182 = smul.addr %s181, 16
        %s183 = scalar_lea.vmem [#allocation2], %s182
        // Predicated region
        $region33: #{tpu_custom_call.1} parent=31 // pred_check
          %p184 = pneg %p55
        $region34: #{tpu_custom_call.1} parent=31 // pred_check_branch
          %186 = sbr.rel (%p184) target = $region36
        $region35: #{tpu_custom_call.1} parent=31 // pred_region
          %188 = dma.done %s180, 256
        $region36: #{tpu_custom_call.1} parent=31 // pred_fallthru
          _
        %s189 = sand.u32 %s42, 1
        %s190 = scalar_lea.sflag [#allocation3], %s189
        %s191 = sand.u32 %s42, 1
        %s192 = smul.addr %s191, 16
        %s193 = scalar_lea.vmem [#allocation2], %s192
        %p194 = pneg %p55
        %p195 = pneg %p52
        %p196 = pneg %p76
        %p197 = pneg %p73
        %p198 = pneg %p97
        %p199 = pneg %p94
        %p200 = pneg %p125
        %p201 = pneg %p122
        %s202 = sand.u32 %s112, 1
        %s203 = scalar_lea.sflag [#allocation4], %s202
        %s204 = sand.u32 %s112, 1
        %s205 = smul.addr %s204, 32
        %s206 = scalar_lea.vmem [#allocation5], %s205
        %s207 = smul.u32 4, %s25
        %s208 = smul.u32 4, %s25
        %v209 = vld [vmem:[%s1] sm:$0xff]
        %v210 = vld [vmem:[%s183] sm:$0xff]
        %v211 = vld [vmem:[%s183 + $0x8] sm:$0xff]
        %v212 = vld [vmem:[%s2] sm:$0xff]
        %214 = vset.pattern.permute.xlu0 0
        %215 = vperm.xlu0 %214, %v212
        %v216 = vpop.permute.xlu0 %215
        %220 = vst [vmem:[#allocation1] ss:$2 sm:$0xff] %v210
        %s221 = scalar_lea.vmem [#allocation1], 16
        %222 = vst [vmem:[%s221] ss:$2 sm:$0xff] %v211
        %v223 = vld.sshfl [vmem:[#allocation1] sm:$0xff pattern:$0x75316420]
        %v224 = vld.sshfl [vmem:[#allocation1 + $0x8] sm:$0xff pattern:$0x75316420]
        %v225 = vld.sshfl [vmem:[#allocation1 + $0x10] sm:$0xff pattern:$0x75316420]
        %v226 = vld.sshfl [vmem:[#allocation1 + $0x18] sm:$0xff pattern:$0x75316420]
        %vm227 = vcmask 31744
        %v229 = vsel %vm227, %v209, 0
        %vm231 = vcmask 1043456
        %v232 = vsel %vm231, %v223, 0
        %v234 = vsel %vm231, %v224, 0
        %v236 = vsel %vm231, %v225, 0
        %v238 = vsel %vm231, %v226, 0
        %240 = vmatpush.msra.mxu0 0.0
        %241 = vmatpush.msra.mxu0 0.0
        %242 = vmatpush.msra.mxu0 0.0
        %243 = vmatpush.msra.mxu0 0.0
        %244 = vmatpush.msra.mxu0 0.0
        %245 = vmatpush.msra.mxu0 0.0
        %246 = vmatpush.msra.mxu0 0.0
        %247 = vmatpush.msra.mxu0 0.0
        %248 = vmatpush.msra.mxu0 0.0
        %249 = vmatpush.msra.mxu0 0.0
        %250 = vmatpush.msra.mxu0 0.0
        %251 = vmatpush.msra.mxu0 0.0
        %252 = vmatpush.msra.mxu0 0.0
        %253 = vmatpush.msra.mxu0 0.0
        %254 = vmatpush.msra.mxu0 0.0
        %v255 = vand.u32 %v232, 4294901760
        %256 = vmatpush.msra.mxu0 %v255
        %v257 = vand.u32 %v229, 4294901760
        %v258 = vsub.f32 %v229, %v257
        %v259 = vand.u32 %v258, 4294901760
        %v260 = vsub.f32 %v258, %v259
        %v261 = vand.u32 %v260, 4294901760
        %262 = vmatmul.f32.gmra.mxu0 %v261
        %v263 = vpop.f32.mrf.mxu0
        %v264 = vadd.f32 %v216, %v263
        %265 = vdwg.mxu0
        %266 = vmatpush.msra.mxu0 0.0
        %267 = vmatpush.msra.mxu0 0.0
        %268 = vmatpush.msra.mxu0 0.0
        %269 = vmatpush.msra.mxu0 0.0
        %270 = vmatpush.msra.mxu0 0.0
        %271 = vmatpush.msra.mxu0 0.0
        %272 = vmatpush.msra.mxu0 0.0
        %273 = vmatpush.msra.mxu0 0.0
        %274 = vmatpush.msra.mxu0 0.0
        %275 = vmatpush.msra.mxu0 0.0
        %276 = vmatpush.msra.mxu0 0.0
        %277 = vmatpush.msra.mxu0 0.0
        %278 = vmatpush.msra.mxu0 0.0
        %279 = vmatpush.msra.mxu0 0.0
        %280 = vmatpush.msra.mxu0 0.0
        %v281 = vand.u32 %v232, 4294901760
        %v282 = vsub.f32 %v232, %v281
        %v283 = vand.u32 %v282, 4294901760
        %v284 = vsub.f32 %v282, %v283
        %v285 = vand.u32 %v284, 4294901760
        %286 = vmatpush.msra.mxu0 %v285
        %v287 = vand.u32 %v229, 4294901760
        %288 = vmatmul.f32.gmra.mxu0 %v287
        %v289 = vpop.f32.mrf.mxu0
        %v290 = vadd.f32 %v264, %v289
        %291 = vdwg.mxu0
        %292 = vmatpush.msra.mxu0 0.0
        %293 = vmatpush.msra.mxu0 0.0
        %294 = vmatpush.msra.mxu0 0.0
        %295 = vmatpush.msra.mxu0 0.0
        %296 = vmatpush.msra.mxu0 0.0
        %297 = vmatpush.msra.mxu0 0.0
        %298 = vmatpush.msra.mxu0 0.0
        %299 = vmatpush.msra.mxu0 0.0
        %300 = vmatpush.msra.mxu0 0.0
        %301 = vmatpush.msra.mxu0 0.0
        %302 = vmatpush.msra.mxu0 0.0
        %303 = vmatpush.msra.mxu0 0.0
        %304 = vmatpush.msra.mxu0 0.0
        %305 = vmatpush.msra.mxu0 0.0
        %306 = vmatpush.msra.mxu0 0.0
        %v307 = vand.u32 %v232, 4294901760
        %v308 = vsub.f32 %v232, %v307
        %309 = vmatpush.msra.mxu0 %v308
        %v310 = vand.u32 %v229, 4294901760
        %v311 = vsub.f32 %v229, %v310
        %312 = vmatmul.f32.gmra.mxu0 %v311
        %v313 = vpop.f32.mrf.mxu0
        %v314 = vadd.f32 %v290, %v313
        %315 = vdwg.mxu0
        %316 = vmatpush.msra.mxu0 0.0
        %317 = vmatpush.msra.mxu0 0.0
        %318 = vmatpush.msra.mxu0 0.0
        %319 = vmatpush.msra.mxu0 0.0
        %320 = vmatpush.msra.mxu0 0.0
        %321 = vmatpush.msra.mxu0 0.0
        %322 = vmatpush.msra.mxu0 0.0
        %323 = vmatpush.msra.mxu0 0.0
        %324 = vmatpush.msra.mxu0 0.0
        %325 = vmatpush.msra.mxu0 0.0
        %326 = vmatpush.msra.mxu0 0.0
        %327 = vmatpush.msra.mxu0 0.0
        %328 = vmatpush.msra.mxu0 0.0
        %329 = vmatpush.msra.mxu0 0.0
        %330 = vmatpush.msra.mxu0 0.0
        %v331 = vand.u32 %v232, 4294901760
        %332 = vmatpush.msra.mxu0 %v331
        %v333 = vand.u32 %v229, 4294901760
        %v334 = vsub.f32 %v229, %v333
        %v335 = vand.u32 %v334, 4294901760
        %336 = vmatmul.f32.gmra.mxu0 %v335
        %v337 = vpop.f32.mrf.mxu0
        %v338 = vadd.f32 %v314, %v337
        %339 = vdwg.mxu0
        %340 = vmatpush.msra.mxu0 0.0
        %341 = vmatpush.msra.mxu0 0.0
        %342 = vmatpush.msra.mxu0 0.0
        %343 = vmatpush.msra.mxu0 0.0
        %344 = vmatpush.msra.mxu0 0.0
        %345 = vmatpush.msra.mxu0 0.0
        %346 = vmatpush.msra.mxu0 0.0
        %347 = vmatpush.msra.mxu0 0.0
        %348 = vmatpush.msra.mxu0 0.0
        %349 = vmatpush.msra.mxu0 0.0
        %350 = vmatpush.msra.mxu0 0.0
        %351 = vmatpush.msra.mxu0 0.0
        %352 = vmatpush.msra.mxu0 0.0
        %353 = vmatpush.msra.mxu0 0.0
        %354 = vmatpush.msra.mxu0 0.0
        %v355 = vand.u32 %v232, 4294901760
        %v356 = vsub.f32 %v232, %v355
        %v357 = vand.u32 %v356, 4294901760
        %358 = vmatpush.msra.mxu0 %v357
        %v359 = vand.u32 %v229, 4294901760
        %360 = vmatmul.f32.gmra.mxu0 %v359
        %v361 = vpop.f32.mrf.mxu0
        %v362 = vadd.f32 %v338, %v361
        %363 = vdwg.mxu0
        %364 = vmatpush.msra.mxu0 0.0
        %365 = vmatpush.msra.mxu0 0.0
        %366 = vmatpush.msra.mxu0 0.0
        %367 = vmatpush.msra.mxu0 0.0
        %368 = vmatpush.msra.mxu0 0.0
        %369 = vmatpush.msra.mxu0 0.0
        %370 = vmatpush.msra.mxu0 0.0
        %371 = vmatpush.msra.mxu0 0.0
        %372 = vmatpush.msra.mxu0 0.0
        %373 = vmatpush.msra.mxu0 0.0
        %374 = vmatpush.msra.mxu0 0.0
        %375 = vmatpush.msra.mxu0 0.0
        %376 = vmatpush.msra.mxu0 0.0
        %377 = vmatpush.msra.mxu0 0.0
        %378 = vmatpush.msra.mxu0 0.0
        %v379 = vand.u32 %v232, 4294901760
        %380 = vmatpush.msra.mxu0 %v379
        %v381 = vand.u32 %v229, 4294901760
        %382 = vmatmul.f32.gmra.mxu0 %v381
        %v383 = vpop.f32.mrf.mxu0
        %v384 = vadd.f32 %v362, %v383
        %385 = vdwg.mxu0
        %386 = vmatpush.msra.mxu0 0.0
        %387 = vmatpush.msra.mxu0 0.0
        %388 = vmatpush.msra.mxu0 0.0
        %389 = vmatpush.msra.mxu0 0.0
        %390 = vmatpush.msra.mxu0 0.0
        %391 = vmatpush.msra.mxu0 0.0
        %392 = vmatpush.msra.mxu0 0.0
        %393 = vmatpush.msra.mxu0 0.0
        %394 = vmatpush.msra.mxu0 0.0
        %395 = vmatpush.msra.mxu0 0.0
        %396 = vmatpush.msra.mxu0 0.0
        %397 = vmatpush.msra.mxu0 0.0
        %398 = vmatpush.msra.mxu0 0.0
        %399 = vmatpush.msra.mxu0 0.0
        %400 = vmatpush.msra.mxu0 0.0
        %v401 = vand.u32 %v234, 4294901760
        %402 = vmatpush.msra.mxu0 %v401
        %v403 = vand.u32 %v229, 4294901760
        %v404 = vsub.f32 %v229, %v403
        %v405 = vand.u32 %v404, 4294901760
        %v406 = vsub.f32 %v404, %v405
        %v407 = vand.u32 %v406, 4294901760
        %408 = vmatmul.f32.gmra.mxu0 %v407
        %v409 = vpop.f32.mrf.mxu0
        %v410 = vadd.f32 %v216, %v409
        %411 = vdwg.mxu0
        %412 = vmatpush.msra.mxu0 0.0
        %413 = vmatpush.msra.mxu0 0.0
        %414 = vmatpush.msra.mxu0 0.0
        %415 = vmatpush.msra.mxu0 0.0
        %416 = vmatpush.msra.mxu0 0.0
        %417 = vmatpush.msra.mxu0 0.0
        %418 = vmatpush.msra.mxu0 0.0
        %419 = vmatpush.msra.mxu0 0.0
        %420 = vmatpush.msra.mxu0 0.0
        %421 = vmatpush.msra.mxu0 0.0
        %422 = vmatpush.msra.mxu0 0.0
        %423 = vmatpush.msra.mxu0 0.0
        %424 = vmatpush.msra.mxu0 0.0
        %425 = vmatpush.msra.mxu0 0.0
        %426 = vmatpush.msra.mxu0 0.0
        %v427 = vand.u32 %v234, 4294901760
        %v428 = vsub.f32 %v234, %v427
        %v429 = vand.u32 %v428, 4294901760
        %v430 = vsub.f32 %v428, %v429
        %v431 = vand.u32 %v430, 4294901760
        %432 = vmatpush.msra.mxu0 %v431
        %v433 = vand.u32 %v229, 4294901760
        %434 = vmatmul.f32.gmra.mxu0 %v433
        %v435 = vpop.f32.mrf.mxu0
        %v436 = vadd.f32 %v410, %v435
        %437 = vdwg.mxu0
        %438 = vmatpush.msra.mxu0 0.0
        %439 = vmatpush.msra.mxu0 0.0
        %440 = vmatpush.msra.mxu0 0.0
        %441 = vmatpush.msra.mxu0 0.0
        %442 = vmatpush.msra.mxu0 0.0
        %443 = vmatpush.msra.mxu0 0.0
        %444 = vmatpush.msra.mxu0 0.0
        %445 = vmatpush.msra.mxu0 0.0
        %446 = vmatpush.msra.mxu0 0.0
        %447 = vmatpush.msra.mxu0 0.0
        %448 = vmatpush.msra.mxu0 0.0
        %449 = vmatpush.msra.mxu0 0.0
        %450 = vmatpush.msra.mxu0 0.0
        %451 = vmatpush.msra.mxu0 0.0
        %452 = vmatpush.msra.mxu0 0.0
        %v453 = vand.u32 %v234, 4294901760
        %v454 = vsub.f32 %v234, %v453
        %455 = vmatpush.msra.mxu0 %v454
        %v456 = vand.u32 %v229, 4294901760
        %v457 = vsub.f32 %v229, %v456
        %458 = vmatmul.f32.gmra.mxu0 %v457
        %v459 = vpop.f32.mrf.mxu0
        %v460 = vadd.f32 %v436, %v459
        %461 = vdwg.mxu0
        %462 = vmatpush.msra.mxu0 0.0
        %463 = vmatpush.msra.mxu0 0.0
        %464 = vmatpush.msra.mxu0 0.0
        %465 = vmatpush.msra.mxu0 0.0
        %466 = vmatpush.msra.mxu0 0.0
        %467 = vmatpush.msra.mxu0 0.0
        %468 = vmatpush.msra.mxu0 0.0
        %469 = vmatpush.msra.mxu0 0.0
        %470 = vmatpush.msra.mxu0 0.0
        %471 = vmatpush.msra.mxu0 0.0
        %472 = vmatpush.msra.mxu0 0.0
        %473 = vmatpush.msra.mxu0 0.0
        %474 = vmatpush.msra.mxu0 0.0
        %475 = vmatpush.msra.mxu0 0.0
        %476 = vmatpush.msra.mxu0 0.0
        %v477 = vand.u32 %v234, 4294901760
        %478 = vmatpush.msra.mxu0 %v477
        %v479 = vand.u32 %v229, 4294901760
        %v480 = vsub.f32 %v229, %v479
        %v481 = vand.u32 %v480, 4294901760
        %482 = vmatmul.f32.gmra.mxu0 %v481
        %v483 = vpop.f32.mrf.mxu0
        %v484 = vadd.f32 %v460, %v483
        %485 = vdwg.mxu0
        %486 = vmatpush.msra.mxu0 0.0
        %487 = vmatpush.msra.mxu0 0.0
        %488 = vmatpush.msra.mxu0 0.0
        %489 = vmatpush.msra.mxu0 0.0
        %490 = vmatpush.msra.mxu0 0.0
        %491 = vmatpush.msra.mxu0 0.0
        %492 = vmatpush.msra.mxu0 0.0
        %493 = vmatpush.msra.mxu0 0.0
        %494 = vmatpush.msra.mxu0 0.0
        %495 = vmatpush.msra.mxu0 0.0
        %496 = vmatpush.msra.mxu0 0.0
        %497 = vmatpush.msra.mxu0 0.0
        %498 = vmatpush.msra.mxu0 0.0
        %499 = vmatpush.msra.mxu0 0.0
        %500 = vmatpush.msra.mxu0 0.0
        %v501 = vand.u32 %v234, 4294901760
        %v502 = vsub.f32 %v234, %v501
        %v503 = vand.u32 %v502, 4294901760
        %504 = vmatpush.msra.mxu0 %v503
        %v505 = vand.u32 %v229, 4294901760
        %506 = vmatmul.f32.gmra.mxu0 %v505
        %v507 = vpop.f32.mrf.mxu0
        %v508 = vadd.f32 %v484, %v507
        %509 = vdwg.mxu0
        %510 = vmatpush.msra.mxu0 0.0
        %511 = vmatpush.msra.mxu0 0.0
        %512 = vmatpush.msra.mxu0 0.0
        %513 = vmatpush.msra.mxu0 0.0
        %514 = vmatpush.msra.mxu0 0.0
        %515 = vmatpush.msra.mxu0 0.0
        %516 = vmatpush.msra.mxu0 0.0
        %517 = vmatpush.msra.mxu0 0.0
        %518 = vmatpush.msra.mxu0 0.0
        %519 = vmatpush.msra.mxu0 0.0
        %520 = vmatpush.msra.mxu0 0.0
        %521 = vmatpush.msra.mxu0 0.0
        %522 = vmatpush.msra.mxu0 0.0
        %523 = vmatpush.msra.mxu0 0.0
        %524 = vmatpush.msra.mxu0 0.0
        %v525 = vand.u32 %v234, 4294901760
        %526 = vmatpush.msra.mxu0 %v525
        %v527 = vand.u32 %v229, 4294901760
        %528 = vmatmul.f32.gmra.mxu0 %v527
        %v529 = vpop.f32.mrf.mxu0
        %v530 = vadd.f32 %v508, %v529
        %531 = vdwg.mxu0
        %532 = vmatpush.msra.mxu0 0.0
        %533 = vmatpush.msra.mxu0 0.0
        %534 = vmatpush.msra.mxu0 0.0
        %535 = vmatpush.msra.mxu0 0.0
        %536 = vmatpush.msra.mxu0 0.0
        %537 = vmatpush.msra.mxu0 0.0
        %538 = vmatpush.msra.mxu0 0.0
        %539 = vmatpush.msra.mxu0 0.0
        %540 = vmatpush.msra.mxu0 0.0
        %541 = vmatpush.msra.mxu0 0.0
        %542 = vmatpush.msra.mxu0 0.0
        %543 = vmatpush.msra.mxu0 0.0
        %544 = vmatpush.msra.mxu0 0.0
        %545 = vmatpush.msra.mxu0 0.0
        %546 = vmatpush.msra.mxu0 0.0
        %v547 = vand.u32 %v236, 4294901760
        %548 = vmatpush.msra.mxu0 %v547
        %v549 = vand.u32 %v229, 4294901760
        %v550 = vsub.f32 %v229, %v549
        %v551 = vand.u32 %v550, 4294901760
        %v552 = vsub.f32 %v550, %v551
        %v553 = vand.u32 %v552, 4294901760
        %554 = vmatmul.f32.gmra.mxu0 %v553
        %v555 = vpop.f32.mrf.mxu0
        %v556 = vadd.f32 %v216, %v555
        %557 = vdwg.mxu0
        %558 = vmatpush.msra.mxu0 0.0
        %559 = vmatpush.msra.mxu0 0.0
        %560 = vmatpush.msra.mxu0 0.0
        %561 = vmatpush.msra.mxu0 0.0
        %562 = vmatpush.msra.mxu0 0.0
        %563 = vmatpush.msra.mxu0 0.0
        %564 = vmatpush.msra.mxu0 0.0
        %565 = vmatpush.msra.mxu0 0.0
        %566 = vmatpush.msra.mxu0 0.0
        %567 = vmatpush.msra.mxu0 0.0
        %568 = vmatpush.msra.mxu0 0.0
        %569 = vmatpush.msra.mxu0 0.0
        %570 = vmatpush.msra.mxu0 0.0
        %571 = vmatpush.msra.mxu0 0.0
        %572 = vmatpush.msra.mxu0 0.0
        %v573 = vand.u32 %v236, 4294901760
        %v574 = vsub.f32 %v236, %v573
        %v575 = vand.u32 %v574, 4294901760
        %v576 = vsub.f32 %v574, %v575
        %v577 = vand.u32 %v576, 4294901760
        %578 = vmatpush.msra.mxu0 %v577
        %v579 = vand.u32 %v229, 4294901760
        %580 = vmatmul.f32.gmra.mxu0 %v579
        %v581 = vpop.f32.mrf.mxu0
        %v582 = vadd.f32 %v556, %v581
        %583 = vdwg.mxu0
        %584 = vmatpush.msra.mxu0 0.0
        %585 = vmatpush.msra.mxu0 0.0
        %586 = vmatpush.msra.mxu0 0.0
        %587 = vmatpush.msra.mxu0 0.0
        %588 = vmatpush.msra.mxu0 0.0
        %589 = vmatpush.msra.mxu0 0.0
        %590 = vmatpush.msra.mxu0 0.0
        %591 = vmatpush.msra.mxu0 0.0
        %592 = vmatpush.msra.mxu0 0.0
        %593 = vmatpush.msra.mxu0 0.0
        %594 = vmatpush.msra.mxu0 0.0
        %595 = vmatpush.msra.mxu0 0.0
        %596 = vmatpush.msra.mxu0 0.0
        %597 = vmatpush.msra.mxu0 0.0
        %598 = vmatpush.msra.mxu0 0.0
        %v599 = vand.u32 %v236, 4294901760
        %v600 = vsub.f32 %v236, %v599
        %601 = vmatpush.msra.mxu0 %v600
        %v602 = vand.u32 %v229, 4294901760
        %v603 = vsub.f32 %v229, %v602
        %604 = vmatmul.f32.gmra.mxu0 %v603
        %v605 = vpop.f32.mrf.mxu0
        %v606 = vadd.f32 %v582, %v605
        %607 = vdwg.mxu0
        %608 = vmatpush.msra.mxu0 0.0
        %609 = vmatpush.msra.mxu0 0.0
        %610 = vmatpush.msra.mxu0 0.0
        %611 = vmatpush.msra.mxu0 0.0
        %612 = vmatpush.msra.mxu0 0.0
        %613 = vmatpush.msra.mxu0 0.0
        %614 = vmatpush.msra.mxu0 0.0
        %615 = vmatpush.msra.mxu0 0.0
        %616 = vmatpush.msra.mxu0 0.0
        %617 = vmatpush.msra.mxu0 0.0
        %618 = vmatpush.msra.mxu0 0.0
        %619 = vmatpush.msra.mxu0 0.0
        %620 = vmatpush.msra.mxu0 0.0
        %621 = vmatpush.msra.mxu0 0.0
        %622 = vmatpush.msra.mxu0 0.0
        %v623 = vand.u32 %v236, 4294901760
        %624 = vmatpush.msra.mxu0 %v623
        %v625 = vand.u32 %v229, 4294901760
        %v626 = vsub.f32 %v229, %v625
        %v627 = vand.u32 %v626, 4294901760
        %628 = vmatmul.f32.gmra.mxu0 %v627
        %v629 = vpop.f32.mrf.mxu0
        %v630 = vadd.f32 %v606, %v629
        %631 = vdwg.mxu0
        %632 = vmatpush.msra.mxu0 0.0
        %633 = vmatpush.msra.mxu0 0.0
        %634 = vmatpush.msra.mxu0 0.0
        %635 = vmatpush.msra.mxu0 0.0
        %636 = vmatpush.msra.mxu0 0.0
        %637 = vmatpush.msra.mxu0 0.0
        %638 = vmatpush.msra.mxu0 0.0
        %639 = vmatpush.msra.mxu0 0.0
        %640 = vmatpush.msra.mxu0 0.0
        %641 = vmatpush.msra.mxu0 0.0
        %642 = vmatpush.msra.mxu0 0.0
        %643 = vmatpush.msra.mxu0 0.0
        %644 = vmatpush.msra.mxu0 0.0
        %645 = vmatpush.msra.mxu0 0.0
        %646 = vmatpush.msra.mxu0 0.0
        %v647 = vand.u32 %v236, 4294901760
        %v648 = vsub.f32 %v236, %v647
        %v649 = vand.u32 %v648, 4294901760
        %650 = vmatpush.msra.mxu0 %v649
        %v651 = vand.u32 %v229, 4294901760
        %652 = vmatmul.f32.gmra.mxu0 %v651
        %v653 = vpop.f32.mrf.mxu0
        %v654 = vadd.f32 %v630, %v653
        %655 = vdwg.mxu0
        %656 = vmatpush.msra.mxu0 0.0
        %657 = vmatpush.msra.mxu0 0.0
        %658 = vmatpush.msra.mxu0 0.0
        %659 = vmatpush.msra.mxu0 0.0
        %660 = vmatpush.msra.mxu0 0.0
        %661 = vmatpush.msra.mxu0 0.0
        %662 = vmatpush.msra.mxu0 0.0
        %663 = vmatpush.msra.mxu0 0.0
        %664 = vmatpush.msra.mxu0 0.0
        %665 = vmatpush.msra.mxu0 0.0
        %666 = vmatpush.msra.mxu0 0.0
        %667 = vmatpush.msra.mxu0 0.0
        %668 = vmatpush.msra.mxu0 0.0
        %669 = vmatpush.msra.mxu0 0.0
        %670 = vmatpush.msra.mxu0 0.0
        %v671 = vand.u32 %v236, 4294901760
        %672 = vmatpush.msra.mxu0 %v671
        %v673 = vand.u32 %v229, 4294901760
        %674 = vmatmul.f32.gmra.mxu0 %v673
        %v675 = vpop.f32.mrf.mxu0
        %v676 = vadd.f32 %v654, %v675
        %677 = vdwg.mxu0
        %678 = vmatpush.msra.mxu0 0.0
        %679 = vmatpush.msra.mxu0 0.0
        %680 = vmatpush.msra.mxu0 0.0
        %681 = vmatpush.msra.mxu0 0.0
        %682 = vmatpush.msra.mxu0 0.0
        %683 = vmatpush.msra.mxu0 0.0
        %684 = vmatpush.msra.mxu0 0.0
        %685 = vmatpush.msra.mxu0 0.0
        %686 = vmatpush.msra.mxu0 0.0
        %687 = vmatpush.msra.mxu0 0.0
        %688 = vmatpush.msra.mxu0 0.0
        %689 = vmatpush.msra.mxu0 0.0
        %690 = vmatpush.msra.mxu0 0.0
        %691 = vmatpush.msra.mxu0 0.0
        %692 = vmatpush.msra.mxu0 0.0
        %v693 = vand.u32 %v238, 4294901760
        %694 = vmatpush.msra.mxu0 %v693
        %v695 = vand.u32 %v229, 4294901760
        %v696 = vsub.f32 %v229, %v695
        %v697 = vand.u32 %v696, 4294901760
        %v698 = vsub.f32 %v696, %v697
        %v699 = vand.u32 %v698, 4294901760
        %700 = vmatmul.f32.gmra.mxu0 %v699
        %v701 = vpop.f32.mrf.mxu0
        %v702 = vadd.f32 %v216, %v701
        %703 = vdwg.mxu0
        %704 = vmatpush.msra.mxu0 0.0
        %705 = vmatpush.msra.mxu0 0.0
        %706 = vmatpush.msra.mxu0 0.0
        %707 = vmatpush.msra.mxu0 0.0
        %708 = vmatpush.msra.mxu0 0.0
        %709 = vmatpush.msra.mxu0 0.0
        %710 = vmatpush.msra.mxu0 0.0
        %711 = vmatpush.msra.mxu0 0.0
        %712 = vmatpush.msra.mxu0 0.0
        %713 = vmatpush.msra.mxu0 0.0
        %714 = vmatpush.msra.mxu0 0.0
        %715 = vmatpush.msra.mxu0 0.0
        %716 = vmatpush.msra.mxu0 0.0
        %717 = vmatpush.msra.mxu0 0.0
        %718 = vmatpush.msra.mxu0 0.0
        %v719 = vand.u32 %v238, 4294901760
        %v720 = vsub.f32 %v238, %v719
        %v721 = vand.u32 %v720, 4294901760
        %v722 = vsub.f32 %v720, %v721
        %v723 = vand.u32 %v722, 4294901760
        %724 = vmatpush.msra.mxu0 %v723
        %v725 = vand.u32 %v229, 4294901760
        %726 = vmatmul.f32.gmra.mxu0 %v725
        %v727 = vpop.f32.mrf.mxu0
        %v728 = vadd.f32 %v702, %v727
        %729 = vdwg.mxu0
        %730 = vmatpush.msra.mxu0 0.0
        %731 = vmatpush.msra.mxu0 0.0
        %732 = vmatpush.msra.mxu0 0.0
        %733 = vmatpush.msra.mxu0 0.0
        %734 = vmatpush.msra.mxu0 0.0
        %735 = vmatpush.msra.mxu0 0.0
        %736 = vmatpush.msra.mxu0 0.0
        %737 = vmatpush.msra.mxu0 0.0
        %738 = vmatpush.msra.mxu0 0.0
        %739 = vmatpush.msra.mxu0 0.0
        %740 = vmatpush.msra.mxu0 0.0
        %741 = vmatpush.msra.mxu0 0.0
        %742 = vmatpush.msra.mxu0 0.0
        %743 = vmatpush.msra.mxu0 0.0
        %744 = vmatpush.msra.mxu0 0.0
        %v745 = vand.u32 %v238, 4294901760
        %v746 = vsub.f32 %v238, %v745
        %747 = vmatpush.msra.mxu0 %v746
        %v748 = vand.u32 %v229, 4294901760
        %v749 = vsub.f32 %v229, %v748
        %750 = vmatmul.f32.gmra.mxu0 %v749
        %v751 = vpop.f32.mrf.mxu0
        %v752 = vadd.f32 %v728, %v751
        %753 = vdwg.mxu0
        %754 = vmatpush.msra.mxu0 0.0
        %755 = vmatpush.msra.mxu0 0.0
        %756 = vmatpush.msra.mxu0 0.0
        %757 = vmatpush.msra.mxu0 0.0
        %758 = vmatpush.msra.mxu0 0.0
        %759 = vmatpush.msra.mxu0 0.0
        %760 = vmatpush.msra.mxu0 0.0
        %761 = vmatpush.msra.mxu0 0.0
        %762 = vmatpush.msra.mxu0 0.0
        %763 = vmatpush.msra.mxu0 0.0
        %764 = vmatpush.msra.mxu0 0.0
        %765 = vmatpush.msra.mxu0 0.0
        %766 = vmatpush.msra.mxu0 0.0
        %767 = vmatpush.msra.mxu0 0.0
        %768 = vmatpush.msra.mxu0 0.0
        %v769 = vand.u32 %v238, 4294901760
        %770 = vmatpush.msra.mxu0 %v769
        %v771 = vand.u32 %v229, 4294901760
        %v772 = vsub.f32 %v229, %v771
        %v773 = vand.u32 %v772, 4294901760
        %774 = vmatmul.f32.gmra.mxu0 %v773
        %v775 = vpop.f32.mrf.mxu0
        %v776 = vadd.f32 %v752, %v775
        %777 = vdwg.mxu0
        %778 = vmatpush.msra.mxu0 0.0
        %779 = vmatpush.msra.mxu0 0.0
        %780 = vmatpush.msra.mxu0 0.0
        %781 = vmatpush.msra.mxu0 0.0
        %782 = vmatpush.msra.mxu0 0.0
        %783 = vmatpush.msra.mxu0 0.0
        %784 = vmatpush.msra.mxu0 0.0
        %785 = vmatpush.msra.mxu0 0.0
        %786 = vmatpush.msra.mxu0 0.0
        %787 = vmatpush.msra.mxu0 0.0
        %788 = vmatpush.msra.mxu0 0.0
        %789 = vmatpush.msra.mxu0 0.0
        %790 = vmatpush.msra.mxu0 0.0
        %791 = vmatpush.msra.mxu0 0.0
        %792 = vmatpush.msra.mxu0 0.0
        %v793 = vand.u32 %v238, 4294901760
        %v794 = vsub.f32 %v238, %v793
        %v795 = vand.u32 %v794, 4294901760
        %796 = vmatpush.msra.mxu0 %v795
        %v797 = vand.u32 %v229, 4294901760
        %798 = vmatmul.f32.gmra.mxu0 %v797
        %v799 = vpop.f32.mrf.mxu0
        %v800 = vadd.f32 %v776, %v799
        %801 = vdwg.mxu0
        %802 = vmatpush.msra.mxu0 0.0
        %803 = vmatpush.msra.mxu0 0.0
        %804 = vmatpush.msra.mxu0 0.0
        %805 = vmatpush.msra.mxu0 0.0
        %806 = vmatpush.msra.mxu0 0.0
        %807 = vmatpush.msra.mxu0 0.0
        %808 = vmatpush.msra.mxu0 0.0
        %809 = vmatpush.msra.mxu0 0.0
        %810 = vmatpush.msra.mxu0 0.0
        %811 = vmatpush.msra.mxu0 0.0
        %812 = vmatpush.msra.mxu0 0.0
        %813 = vmatpush.msra.mxu0 0.0
        %814 = vmatpush.msra.mxu0 0.0
        %815 = vmatpush.msra.mxu0 0.0
        %816 = vmatpush.msra.mxu0 0.0
        %v817 = vand.u32 %v238, 4294901760
        %818 = vmatpush.msra.mxu0 %v817
        %v819 = vand.u32 %v229, 4294901760
        %820 = vmatmul.f32.gmra.mxu0 %v819
        %v821 = vpop.f32.mrf.mxu0
        %v822 = vadd.f32 %v800, %v821
        %823 = vdwg.mxu0
        %824 = vst [vmem:[%s206] sm:$0xff] %v384
        %825 = vst [vmem:[%s206 + $0x8] sm:$0xff] %v530
        %826 = vst [vmem:[%s206 + $0x10] sm:$0xff] %v676
        %827 = vst [vmem:[%s206 + $0x18] sm:$0xff] %v822
        %s828 = sand.u32 %s112, 1
        %s829 = scalar_lea.sflag [#allocation4], %s828
        %s830 = sand.u32 %s112, 1
        %s831 = smul.addr %s830, 32
        %s832 = scalar_lea.vmem [#allocation5], %s831
        // Predicated region
        $region37: #{tpu_custom_call.1} parent=31 // pred_check
          %p833 = pneg %p122
        $region38: #{tpu_custom_call.1} parent=31 // pred_check_branch
          %835 = sbr.rel (%p833) target = $region40
        $region39: #{tpu_custom_call.1} parent=31 // pred_region
          %s836 = smul.u32 4, %s25
          %838 = vsyncadd %s829, 0
          %s839 = smul.addr %s24, 4
          %s840 = sadd.s32 %s836, %s839
          %s841 = smul.addr %s840, 8
          %s842 = scalar_lea.hbm %s3, %s841
          %s844 = sshll.u32 %s832, 4
          %s845 = int_to_ptr.vmem [resolvable:$true] %s844
          %s846 = sshll.u32 %s842, 4
          %s847 = int_to_ptr.hbm [resolvable:$true] %s846
          %849 = dma.vmem_to_hbm [thread:$0]  %s845, 512, %s847, %s829
        $region40: #{tpu_custom_call.1} parent=31 // pred_fallthru
          _
      $region32: #{tpu_custom_call.1} parent=5 // pred_fallthru
        _
      %p850 = scmp.le.s32.totalorder 2, %s15
      // Predicated region
      $region41: #{tpu_custom_call.1} parent=5 // pred_check
        %p851 = pneg %p850
      $region42: #{tpu_custom_call.1} parent=5 // pred_check_branch
        %853 = sbr.rel (%p851) target = $region44
      $region43: #{tpu_custom_call.1} parent=5 // pred_region
        %s854 = ssub.s32 %s15, 2
        // Predicated region
        $region45: #{tpu_custom_call.1} parent=43 // pred_check
          %p855 = pneg %p128
        $region46: #{tpu_custom_call.1} parent=43 // pred_check_branch
          %857 = sbr.rel (%p855) target = $region48
        $region47: #{tpu_custom_call.1} parent=43 // pred_region
          %s858 = sand.u32 %s113, 1
          %s859 = scalar_lea.sflag [#allocation4], %s858
          %s860 = sand.u32 %s113, 1
          %s861 = smul.addr %s860, 32
          %s862 = scalar_lea.vmem [#allocation5], %s861
          %864 = dma.done %s859, 512
        $region48: #{tpu_custom_call.1} parent=43 // pred_fallthru
          _
      $region44: #{tpu_custom_call.1} parent=5 // pred_fallthru
        _
    $region6: #{tpu_custom_call.1} parent=1 // loop_footer
      %s19 = sadd.s32 1, %s15
    $region7: #{tpu_custom_call.1} parent=1 // loop_footer_branch
      %14 = sbr.rel target = $region3
    $region8: #{tpu_custom_call.1} parent=1 // loop_exit
      _
    %865 = vsyncpa [#allocation3], 1
    %s866 = scalar_lea.sflag [#allocation3], 1
    %867 = vsyncpa %s866, 1
    %868 = vsyncpa [#allocation4], 1
    %s869 = scalar_lea.sflag [#allocation4], 1
    %870 = vsyncpa %s869, 1

</llo_original>
